<compile_context>
chip_gen: v6e
topology: v6e:2x2x1
jax: 0.10.0
libtpu: 0.0.40
codegen_flags: <defaults>
</compile_context>

<pallas_src>
import functools

import jax
import jax.numpy as jnp
from jax import lax
from jax.experimental import pallas as pl
from jax.experimental.pallas import tpu as pltpu


def resblock_kernel(x_ref, w1_ref, w2_ref, o_ref, *, H, W, NB):
    # x_ref : (1, Cin, NB*H*W)  one batch chunk, channel-major, flat spatial (lane-dense)
    # w1_ref: (Cmid, 9*Cin + 1) bf16, tap-major (col = t*Cin + c, t = 3*i + j), last col = b1
    # w2_ref: (Cin, Cmid + 1)   bf16, last col = b2
    # o_ref : (1, Cin, NB*H*W)
    HW = H * W
    lanes = NB * HW
    x = x_ref[0]                              # (Cin, lanes) f32; also the residual

    # Per-image flat position -> (row, col).  Shift/AND (no integer div/mod) when the
    # sizes are powers of two; masks stay per-image even with batch folded into lanes.
    pos = lax.broadcasted_iota(jnp.int32, (1, lanes), 1)
    p_img = (pos & (HW - 1)) if (HW & (HW - 1)) == 0 else (pos % HW)
    if (W & (W - 1)) == 0:
        row = p_img >> (W.bit_length() - 1)
        col = p_img & (W - 1)
    else:
        row = p_img // W
        col = p_img % W

    taps = []
    for i in range(3):
        for j in range(3):
            dh, dw = i - 1, j - 1
            if dh == 0 and dw == 0:
                taps.append(x)
                continue
            # tap[c, p] = x[c, p + dh*W + dw] where in-bounds within the image, else 0.
            # Cross-image / wrap-around contamination is always masked out.
            shift = (-(dh * W + dw)) % lanes
            rolled = pltpu.roll(x, shift, axis=1)        # XLU rotate, no VMEM copies
            mask = None
            if dh > 0:
                mask = row < (H - dh)
            elif dh < 0:
                mask = row >= -dh
            if dw > 0:
                m2 = col < (W - dw)
                mask = m2 if mask is None else (mask & m2)
            elif dw < 0:
                m2 = col >= -dw
                mask = m2 if mask is None else (mask & m2)
            taps.append(jnp.where(mask, rolled, 0.0))

    ones_row = jnp.ones((1, lanes), jnp.float32)

    # im2col stack (9*Cin + 1, lanes); ones row carries the conv1 bias. Single K=37 dot.
    stack = jnp.concatenate(taps + [ones_row], axis=0).astype(jnp.bfloat16)
    acc = jnp.dot(w1_ref[...], stack, preferred_element_type=jnp.float32)   # (Cmid, lanes)
    hid = jnp.maximum(acc, 0.0)

    # 1x1 conv with folded bias, then residual + ReLU, single lane-dense store.
    hid_aug = jnp.concatenate([hid, ones_row], axis=0).astype(jnp.bfloat16)
    out = jnp.dot(w2_ref[...], hid_aug, preferred_element_type=jnp.float32)  # (Cin, lanes)
    out = jnp.maximum(out + x, 0.0)
    o_ref[0] = out.astype(o_ref.dtype)


def resblock_forward(x_nchw, w1_oihw, b1, w2_oi, b2, *, num_chunks=None):
    """x_nchw: [N, Cin, H, W] float32 (PyTorch layout). Returns [N, Cin, H, W]."""
    N, Cin, H, W = x_nchw.shape
    Cmid = w1_oihw.shape[0]
    HW = H * W

    # Default: 2 chunks (one per v7x TensorCore).  On single-TC v5e/v6e, num_chunks=1
    # folds the whole batch into the lane axis of a single grid step.
    if num_chunks is None:
        num_chunks = 2 if (N >= 2 and N % 2 == 0) else 1
    assert N % num_chunks == 0, "num_chunks must divide N"
    NB = N // num_chunks
    lanes = NB * HW

    # (N, Cin, HW) -> (num_chunks, Cin, NB*HW).  For NB == 1 (default at N=2) the
    # transpose is over a size-1 axis, i.e. a free reshape.
    x_flat = x_nchw.reshape(num_chunks, NB, Cin, HW)
    x_flat = jnp.transpose(x_flat, (0, 2, 1, 3)).reshape(num_chunks, Cin, lanes)

    # Tap-major weight matrix with folded bias: w1_aug[m, t*Cin + c] = w1[m, c, i, j],
    # t = 3*i + j; last column = b1.  Cast to bf16 once here (MXU-native operand).
    w1_mat = jnp.transpose(w1_oihw, (0, 2, 3, 1)).reshape(Cmid, 9 * Cin)
    w1_aug = jnp.concatenate([w1_mat, b1[:, None]], axis=1).astype(jnp.bfloat16)
    w2_aug = jnp.concatenate([w2_oi, b2[:, None]], axis=1).astype(jnp.bfloat16)

    flops = 2 * N * HW * ((9 * Cin + 1) * Cmid + (Cmid + 1) * Cin) + 3 * N * HW * Cin
    bytes_accessed = 4 * 2 * N * Cin * HW + 2 * (w1_aug.size + w2_aug.size)

    out_flat = pl.pallas_call(
        functools.partial(resblock_kernel, H=H, W=W, NB=NB),
        out_shape=jax.ShapeDtypeStruct((num_chunks, Cin, lanes), x_nchw.dtype),
        grid=(num_chunks,),
        in_specs=[
            pl.BlockSpec((1, Cin, lanes), lambda c: (c, 0, 0)),
            pl.BlockSpec((Cmid, 9 * Cin + 1), lambda c: (0, 0)),
            pl.BlockSpec((Cin, Cmid + 1), lambda c: (0, 0)),
        ],
        out_specs=pl.BlockSpec((1, Cin, lanes), lambda c: (c, 0, 0)),
        compiler_params=pltpu.CompilerParams(
            dimension_semantics=("parallel",),
            vmem_limit_bytes=32 * 1024 * 1024,
        ),
        cost_estimate=pl.CostEstimate(
            flops=flops, transcendentals=0, bytes_accessed=bytes_accessed),
    )(x_flat, w1_aug, w2_aug)

    # Inverse layout transform (free for NB == 1).
    out = out_flat.reshape(num_chunks, Cin, NB, HW)
    out = jnp.transpose(out, (0, 2, 1, 3)).reshape(N, Cin, H, W)
    return out


def reference_forward(x_nchw, w1_oihw, b1, w2_oi, b2):
    """Pure-JAX NCHW f32 reference (lax conv) for correctness check."""
    y = lax.conv_general_dilated(
        x_nchw, w1_oihw, window_strides=(1, 1), padding="SAME",
        dimension_numbers=("NCHW", "OIHW", "NCHW"))
    y = jnp.maximum(y + b1[None, :, None, None], 0.0)
    z = jnp.einsum("oc,nchw->nohw", w2_oi, y) + b2[None, :, None, None]
    return jnp.maximum(z + x_nchw, 0.0)


if __name__ == "__main__":
    # ResBlock(input_channels=4, channel=8) at small shapes.
    N, Cin, H, W = 2, 4, 16, 16
    Cmid = 8

    key = jax.random.PRNGKey(0)
    kx, kw1, kb1, kw2, kb2 = jax.random.split(key, 5)

    x = jax.random.normal(kx, (N, Cin, H, W), jnp.float32)
    # conv1: nn.Conv2d(Cin, Cmid, 3, padding=1) -> weight (Cmid, Cin, 3, 3), bias (Cmid,)
    w1 = jax.random.normal(kw1, (Cmid, Cin, 3, 3), jnp.float32) * 0.1
    b1 = jax.random.normal(kb1, (Cmid,), jnp.float32) * 0.1
    # conv2: nn.Conv2d(Cmid, Cin, 1) -> weight squeezed to (Cin, Cmid), bias (Cin,)
    w2 = jax.random.normal(kw2, (Cin, Cmid), jnp.float32) * 0.1
    b2 = jax.random.normal(kb2, (Cin,), jnp.float32) * 0.1

    out = jax.block_until_ready(jax.jit(resblock_forward)(x, w1, b1, w2, b2))
    ref = jax.block_until_ready(reference_forward(x, w1, b1, w2, b2))

    assert out.shape == (N, Cin, H, W)
    # Kernel uses bf16 matmul operands (f32 accumulation); compare vs the f32
    # reference with a correspondingly relaxed tolerance.
    assert jnp.allclose(out, ref, atol=2e-2, rtol=2e-2), "mismatch vs reference"
    print("KERNEL_OK")
</pallas_src>

<mosaic_0001>
module attributes {stable_mosaic.version = 11 : i64} {
  func.func @resblock_kernel(%arg0: i32, %arg1: memref<1x4x256xf32, #tpu.memory_space<vmem>>, %arg2: memref<8x37xbf16, #tpu.memory_space<vmem>>, %arg3: memref<4x9xbf16, #tpu.memory_space<vmem>>, %arg4: memref<1x4x256xf32, #tpu.memory_space<vmem>>) attributes {dimension_semantics = [#tpu.dimension_semantics<parallel>], iteration_bounds = array<i64: 2>, scalar_prefetch = 0 : i64, scratch_operands = 0 : i64, tpu.core_type = #tpu.core_type<tc>, window_params = [{transform_indices = @transform_0, window_bounds = array<i64: 1, 4, 256>}, {pipeline_mode = #tpu.pipeline_mode<synchronous>, transform_indices = @transform_1, window_bounds = array<i64: 8, 37>}, {pipeline_mode = #tpu.pipeline_mode<synchronous>, transform_indices = @transform_2, window_bounds = array<i64: 4, 9>}, {transform_indices = @transform_3, window_bounds = array<i64: 1, 4, 256>}]} {
    %c0 = arith.constant 0 : index
    %c0_0 = arith.constant 0 : index
    %c0_1 = arith.constant 0 : index
    %0 = vector.load %arg1[%c0, %c0_0, %c0_1] : memref<1x4x256xf32, #tpu.memory_space<vmem>>, vector<1x4x256xf32>
    %1 = vector.shape_cast %0 : vector<1x4x256xf32> to vector<4x256xf32>
    %2 = tpu.iota {dimensions = array<i32: 1>} : vector<1x256xi32>
    %c255_i32 = arith.constant 255 : i32
    %3 = vector.broadcast %c255_i32 : i32 to vector<1x256xi32>
    %4 = arith.andi %2, %3 : vector<1x256xi32>
    %c4_i32 = arith.constant 4 : i32
    %5 = vector.broadcast %c4_i32 : i32 to vector<1x256xi32>
    %6 = arith.shrsi %4, %5 : vector<1x256xi32>
    %c15_i32 = arith.constant 15 : i32
    %7 = vector.broadcast %c15_i32 : i32 to vector<1x256xi32>
    %8 = arith.andi %4, %7 : vector<1x256xi32>
    %c17_i32 = arith.constant 17 : i32
    %9 = tpu.dynamic_rotate %1 by %c17_i32 dim 1 : vector<4x256xf32>, i32 -> vector<4x256xf32>
    %c1_i32 = arith.constant 1 : i32
    %10 = vector.broadcast %c1_i32 : i32 to vector<1x256xi32>
    %11 = arith.cmpi sge, %6, %10 : vector<1x256xi32>
    %c1_i32_2 = arith.constant 1 : i32
    %12 = vector.broadcast %c1_i32_2 : i32 to vector<1x256xi32>
    %13 = arith.cmpi sge, %8, %12 : vector<1x256xi32>
    %14 = arith.andi %11, %13 : vector<1x256xi1>
    %cst = arith.constant 0.000000e+00 : f32
    %15 = vector.shape_cast %14 : vector<1x256xi1> to vector<1x256xi1>
    %16 = vector.broadcast %15 : vector<1x256xi1> to vector<4x256xi1>
    %17 = vector.broadcast %cst : f32 to vector<4x256xf32>
    %18 = arith.select %16, %9, %17 : vector<4x256xi1>, vector<4x256xf32>
    %c16_i32 = arith.constant 16 : i32
    %19 = tpu.dynamic_rotate %1 by %c16_i32 dim 1 : vector<4x256xf32>, i32 -> vector<4x256xf32>
    %c1_i32_3 = arith.constant 1 : i32
    %20 = vector.broadcast %c1_i32_3 : i32 to vector<1x256xi32>
    %21 = arith.cmpi sge, %6, %20 : vector<1x256xi32>
    %cst_4 = arith.constant 0.000000e+00 : f32
    %22 = vector.shape_cast %21 : vector<1x256xi1> to vector<1x256xi1>
    %23 = vector.broadcast %22 : vector<1x256xi1> to vector<4x256xi1>
    %24 = vector.broadcast %cst_4 : f32 to vector<4x256xf32>
    %25 = arith.select %23, %19, %24 : vector<4x256xi1>, vector<4x256xf32>
    %c15_i32_5 = arith.constant 15 : i32
    %26 = tpu.dynamic_rotate %1 by %c15_i32_5 dim 1 : vector<4x256xf32>, i32 -> vector<4x256xf32>
    %c1_i32_6 = arith.constant 1 : i32
    %27 = vector.broadcast %c1_i32_6 : i32 to vector<1x256xi32>
    %28 = arith.cmpi sge, %6, %27 : vector<1x256xi32>
    %c15_i32_7 = arith.constant 15 : i32
    %29 = vector.broadcast %c15_i32_7 : i32 to vector<1x256xi32>
    %30 = arith.cmpi slt, %8, %29 : vector<1x256xi32>
    %31 = arith.andi %28, %30 : vector<1x256xi1>
    %cst_8 = arith.constant 0.000000e+00 : f32
    %32 = vector.shape_cast %31 : vector<1x256xi1> to vector<1x256xi1>
    %33 = vector.broadcast %32 : vector<1x256xi1> to vector<4x256xi1>
    %34 = vector.broadcast %cst_8 : f32 to vector<4x256xf32>
    %35 = arith.select %33, %26, %34 : vector<4x256xi1>, vector<4x256xf32>
    %c1_i32_9 = arith.constant 1 : i32
    %36 = tpu.dynamic_rotate %1 by %c1_i32_9 dim 1 : vector<4x256xf32>, i32 -> vector<4x256xf32>
    %c1_i32_10 = arith.constant 1 : i32
    %37 = vector.broadcast %c1_i32_10 : i32 to vector<1x256xi32>
    %38 = arith.cmpi sge, %8, %37 : vector<1x256xi32>
    %cst_11 = arith.constant 0.000000e+00 : f32
    %39 = vector.shape_cast %38 : vector<1x256xi1> to vector<1x256xi1>
    %40 = vector.broadcast %39 : vector<1x256xi1> to vector<4x256xi1>
    %41 = vector.broadcast %cst_11 : f32 to vector<4x256xf32>
    %42 = arith.select %40, %36, %41 : vector<4x256xi1>, vector<4x256xf32>
    %c255_i32_12 = arith.constant 255 : i32
    %43 = tpu.dynamic_rotate %1 by %c255_i32_12 dim 1 : vector<4x256xf32>, i32 -> vector<4x256xf32>
    %c15_i32_13 = arith.constant 15 : i32
    %44 = vector.broadcast %c15_i32_13 : i32 to vector<1x256xi32>
    %45 = arith.cmpi slt, %8, %44 : vector<1x256xi32>
    %cst_14 = arith.constant 0.000000e+00 : f32
    %46 = vector.shape_cast %45 : vector<1x256xi1> to vector<1x256xi1>
    %47 = vector.broadcast %46 : vector<1x256xi1> to vector<4x256xi1>
    %48 = vector.broadcast %cst_14 : f32 to vector<4x256xf32>
    %49 = arith.select %47, %43, %48 : vector<4x256xi1>, vector<4x256xf32>
    %c241_i32 = arith.constant 241 : i32
    %50 = tpu.dynamic_rotate %1 by %c241_i32 dim 1 : vector<4x256xf32>, i32 -> vector<4x256xf32>
    %c15_i32_15 = arith.constant 15 : i32
    %51 = vector.broadcast %c15_i32_15 : i32 to vector<1x256xi32>
    %52 = arith.cmpi slt, %6, %51 : vector<1x256xi32>
    %c1_i32_16 = arith.constant 1 : i32
    %53 = vector.broadcast %c1_i32_16 : i32 to vector<1x256xi32>
    %54 = arith.cmpi sge, %8, %53 : vector<1x256xi32>
    %55 = arith.andi %52, %54 : vector<1x256xi1>
    %cst_17 = arith.constant 0.000000e+00 : f32
    %56 = vector.shape_cast %55 : vector<1x256xi1> to vector<1x256xi1>
    %57 = vector.broadcast %56 : vector<1x256xi1> to vector<4x256xi1>
    %58 = vector.broadcast %cst_17 : f32 to vector<4x256xf32>
    %59 = arith.select %57, %50, %58 : vector<4x256xi1>, vector<4x256xf32>
    %c240_i32 = arith.constant 240 : i32
    %60 = tpu.dynamic_rotate %1 by %c240_i32 dim 1 : vector<4x256xf32>, i32 -> vector<4x256xf32>
    %c15_i32_18 = arith.constant 15 : i32
    %61 = vector.broadcast %c15_i32_18 : i32 to vector<1x256xi32>
    %62 = arith.cmpi slt, %6, %61 : vector<1x256xi32>
    %cst_19 = arith.constant 0.000000e+00 : f32
    %63 = vector.shape_cast %62 : vector<1x256xi1> to vector<1x256xi1>
    %64 = vector.broadcast %63 : vector<1x256xi1> to vector<4x256xi1>
    %65 = vector.broadcast %cst_19 : f32 to vector<4x256xf32>
    %66 = arith.select %64, %60, %65 : vector<4x256xi1>, vector<4x256xf32>
    %c239_i32 = arith.constant 239 : i32
    %67 = tpu.dynamic_rotate %1 by %c239_i32 dim 1 : vector<4x256xf32>, i32 -> vector<4x256xf32>
    %c15_i32_20 = arith.constant 15 : i32
    %68 = vector.broadcast %c15_i32_20 : i32 to vector<1x256xi32>
    %69 = arith.cmpi slt, %6, %68 : vector<1x256xi32>
    %c15_i32_21 = arith.constant 15 : i32
    %70 = vector.broadcast %c15_i32_21 : i32 to vector<1x256xi32>
    %71 = arith.cmpi slt, %8, %70 : vector<1x256xi32>
    %72 = arith.andi %69, %71 : vector<1x256xi1>
    %cst_22 = arith.constant 0.000000e+00 : f32
    %73 = vector.shape_cast %72 : vector<1x256xi1> to vector<1x256xi1>
    %74 = vector.broadcast %73 : vector<1x256xi1> to vector<4x256xi1>
    %75 = vector.broadcast %cst_22 : f32 to vector<4x256xf32>
    %76 = arith.select %74, %67, %75 : vector<4x256xi1>, vector<4x256xf32>
    %cst_23 = arith.constant 1.000000e+00 : f32
    %77 = vector.broadcast %cst_23 : f32 to vector<1x256xf32>
    %78 = tpu.concatenate %18, %25, %35, %42, %1, %49, %59, %66, %76, %77 in 0 : vector<4x256xf32>, vector<4x256xf32>, vector<4x256xf32>, vector<4x256xf32>, vector<4x256xf32>, vector<4x256xf32>, vector<4x256xf32>, vector<4x256xf32>, vector<4x256xf32>, vector<1x256xf32> -> vector<37x256xf32>
    %79 = arith.truncf %78 : vector<37x256xf32> to vector<37x256xbf16>
    %c0_24 = arith.constant 0 : index
    %c0_25 = arith.constant 0 : index
    %80 = vector.load %arg2[%c0_24, %c0_25] : memref<8x37xbf16, #tpu.memory_space<vmem>>, vector<8x37xbf16>
    %cst_26 = arith.constant dense<0.000000e+00> : vector<8x256xf32>
    %81 = tpu.matmul %80, %79, %cst_26 {dimension_numbers = #tpu.dot_dimension_numbers<[1], [0], [0], [1], [0, 0, 1, 1], [], []>} : vector<8x37xbf16>, vector<37x256xbf16>, vector<8x256xf32> -> vector<8x256xf32>
    %cst_27 = arith.constant 0.000000e+00 : f32
    %82 = vector.broadcast %cst_27 : f32 to vector<8x256xf32>
    %83 = arith.maximumf %81, %82 : vector<8x256xf32>
    %84 = tpu.concatenate %83, %77 in 0 : vector<8x256xf32>, vector<1x256xf32> -> vector<9x256xf32>
    %85 = arith.truncf %84 : vector<9x256xf32> to vector<9x256xbf16>
    %c0_28 = arith.constant 0 : index
    %c0_29 = arith.constant 0 : index
    %86 = vector.load %arg3[%c0_28, %c0_29] : memref<4x9xbf16, #tpu.memory_space<vmem>>, vector<4x9xbf16>
    %cst_30 = arith.constant dense<0.000000e+00> : vector<4x256xf32>
    %87 = tpu.matmul %86, %85, %cst_30 {dimension_numbers = #tpu.dot_dimension_numbers<[1], [0], [0], [1], [0, 0, 1, 1], [], []>} : vector<4x9xbf16>, vector<9x256xbf16>, vector<4x256xf32> -> vector<4x256xf32>
    %88 = arith.addf %87, %1 : vector<4x256xf32>
    %cst_31 = arith.constant 0.000000e+00 : f32
    %89 = vector.broadcast %cst_31 : f32 to vector<4x256xf32>
    %90 = arith.maximumf %88, %89 : vector<4x256xf32>
    %c0_32 = arith.constant 0 : index
    %c0_33 = arith.constant 0 : index
    %c0_34 = arith.constant 0 : index
    %91 = vector.load %arg4[%c0_32, %c0_33, %c0_34] : memref<1x4x256xf32, #tpu.memory_space<vmem>>, vector<1x4x256xf32>
    %92 = vector.shape_cast %91 : vector<1x4x256xf32> to vector<4x256xf32>
    %93 = vector.shape_cast %90 : vector<4x256xf32> to vector<1x4x256xf32>
    tpu.vector_store %arg4[%c0_32, %c0_33, %c0_34], %93 {strides = array<i32>} : memref<1x4x256xf32, #tpu.memory_space<vmem>>, vector<1x4x256xf32>,
    return
  }
  func.func @transform_0(%arg0: i32) -> (i32, i32, i32) {
    %c0_i32 = arith.constant 0 : i32
    %c0_i32_0 = arith.constant 0 : i32
    %c0_i32_1 = arith.constant 0 : i32
    return %arg0, %c0_i32, %c0_i32_0 : i32, i32, i32
  }
  func.func @transform_1(%arg0: i32) -> (i32, i32) {
    %c0_i32 = arith.constant 0 : i32
    %c0_i32_0 = arith.constant 0 : i32
    %c0_i32_1 = arith.constant 0 : i32
    return %c0_i32, %c0_i32_0 : i32, i32
  }
  func.func @transform_2(%arg0: i32) -> (i32, i32) {
    %c0_i32 = arith.constant 0 : i32
    %c0_i32_0 = arith.constant 0 : i32
    %c0_i32_1 = arith.constant 0 : i32
    return %c0_i32, %c0_i32_0 : i32, i32
  }
  func.func @transform_3(%arg0: i32) -> (i32, i32, i32) {
    %c0_i32 = arith.constant 0 : i32
    %c0_i32_0 = arith.constant 0 : i32
    %c0_i32_1 = arith.constant 0 : i32
    return %arg0, %c0_i32, %c0_i32_0 : i32, i32, i32
  }
}

</mosaic_0001>

<llo_original>
// kernel: resblock_forward.1
$region0: #{resblock_forward.1}
  #allocation0 [shape = 'u32[]', space=smem, size = 0x4, offset = 0x4, fixed_abs, tag = 'smem constant byte address 0x4 - core index']
  #allocation1 [shape = 'u32[144,128]{1,0:T(1,128)}', space=vmem, size = 0x12000, scoped, tag = 'internal scratch']
  %s0 = inlined_call_operand.vmem [shape: f32[2,4,256], index: 0, kind: input, shape index: {}]
  %s1 = inlined_call_operand.vmem [shape: bf16[8,37], index: 1, kind: input, shape index: {}]
  %s2 = inlined_call_operand.vmem [shape: bf16[4,9], index: 2, kind: input, shape index: {}]
  %s3 = inlined_call_operand.vmem [shape: f32[2,4,256], index: 3, kind: output, shape index: {}]
  %s4 = sld [smem:[#allocation0]]
  $region45: #{resblock_forward.1} parent=0
    _
  %s6 = ssub.s32 1, %s4
  %s7 = scalar_select 0, %s6, %s4
  loop: start=0, step=1, limit=4
  $region2: #{resblock_forward.1} parent=0 // loop_pre_header
    _
  $region3: #{resblock_forward.1} parent=0 // loop_header
    %s9 = sphi 0, %s13
    %p10 = scmp.ge.s32.totalorder %s9, 4
    %s19 = sphi 0, %s21
    %s22 = sphi 0, %s19
    %s23 = sphi 0, %s22
    %s39 = sphi 0, %s23
    %s43 = sphi 0, %s43
    %s45 = sphi 0, %s43
    %s46 = sphi 0, %s45
    %s60 = sphi 0, %s46
    %s64 = sphi 0, %s64
    %s66 = sphi 0, %s64
    %s67 = sphi 0, %s66
    %s81 = sphi 0, %s67
    %s87 = sphi 0, %s89
    %s90 = sphi 0, %s87
    %s91 = sphi 0, %s90
    %s107 = sphi 0, %s91
  $region4: #{resblock_forward.1} parent=0 // loop_header_branch
    %12 = sbr.rel (%p10) target = $region8
  $region5: #{resblock_forward.1} parent=0 // loop_body
    %s14 = ssub.s32 %s9, 1
    %s15 = ssub.s32 %s9, 2
    %s16 = sadd.s32 %s9, 1
    %s17 = ssub.s32 %s9, %s16
    %p18 = scmp.eq.s32.totalorder %s17, 0
    %s20 = sadd.s32 %s19, 1
    %s21 = scalar_select %p18, %s19, %s20
    %p24 = pneg %p18
    %p25 = scmp.eq.s32.totalorder %s9, 1
    %p26 = por %p24, %p25
    %p27 = scmp.ne.s32.totalorder %s19, %s22
    %p28 = scmp.eq.s32.totalorder %s9, 0
    %p29 = por %p27, %p28
    %p30 = scmp.ne.s32.totalorder %s19, %s22
    %p31 = scmp.eq.s32.totalorder %s14, 1
    %p32 = por %p30, %p31
    %p33 = scmp.ne.s32.totalorder %s22, %s23
    %p34 = scmp.eq.s32.totalorder %s14, 0
    %p35 = por %p33, %p34
    %p36 = scmp.ne.s32.totalorder %s22, %s23
    %p37 = scmp.eq.s32.totalorder %s15, 1
    %p38 = por %p36, %p37
    %p40 = scmp.ne.s32.totalorder %s23, %s39
    %p41 = scmp.eq.s32.totalorder %s15, 0
    %p42 = por %p40, %p41
    %s44 = sadd.s32 %s43, 1
    %p47 = scmp.eq.s32.totalorder %s9, 1
    %p48 = scmp.ne.s32.totalorder %s43, %s45
    %p49 = scmp.eq.s32.totalorder %s9, 0
    %p50 = por %p48, %p49
    %p51 = scmp.ne.s32.totalorder %s43, %s45
    %p52 = scmp.eq.s32.totalorder %s14, 1
    %p53 = por %p51, %p52
    %p54 = scmp.ne.s32.totalorder %s45, %s46
    %p55 = scmp.eq.s32.totalorder %s14, 0
    %p56 = por %p54, %p55
    %p57 = scmp.ne.s32.totalorder %s45, %s46
    %p58 = scmp.eq.s32.totalorder %s15, 1
    %p59 = por %p57, %p58
    %p61 = scmp.ne.s32.totalorder %s46, %s60
    %p62 = scmp.eq.s32.totalorder %s15, 0
    %p63 = por %p61, %p62
    %s65 = sadd.s32 %s64, 1
    %p68 = scmp.eq.s32.totalorder %s9, 1
    %p69 = scmp.ne.s32.totalorder %s64, %s66
    %p70 = scmp.eq.s32.totalorder %s9, 0
    %p71 = por %p69, %p70
    %p72 = scmp.ne.s32.totalorder %s64, %s66
    %p73 = scmp.eq.s32.totalorder %s14, 1
    %p74 = por %p72, %p73
    %p75 = scmp.ne.s32.totalorder %s66, %s67
    %p76 = scmp.eq.s32.totalorder %s14, 0
    %p77 = por %p75, %p76
    %p78 = scmp.ne.s32.totalorder %s66, %s67
    %p79 = scmp.eq.s32.totalorder %s15, 1
    %p80 = por %p78, %p79
    %p82 = scmp.ne.s32.totalorder %s67, %s81
    %p83 = scmp.eq.s32.totalorder %s15, 0
    %p84 = por %p82, %p83
    %s85 = ssub.s32 %s9, %s16
    %p86 = scmp.eq.s32.totalorder %s85, 0
    %s88 = sadd.s32 %s87, 1
    %s89 = scalar_select %p86, %s87, %s88
    %p92 = pneg %p86
    %p93 = scmp.eq.s32.totalorder %s9, 1
    %p94 = por %p92, %p93
    %p95 = scmp.ne.s32.totalorder %s87, %s90
    %p96 = scmp.eq.s32.totalorder %s9, 0
    %p97 = por %p95, %p96
    %p98 = scmp.ne.s32.totalorder %s87, %s90
    %p99 = scmp.eq.s32.totalorder %s14, 1
    %p100 = por %p98, %p99
    %p101 = scmp.ne.s32.totalorder %s90, %s91
    %p102 = scmp.eq.s32.totalorder %s14, 0
    %p103 = por %p101, %p102
    %p104 = scmp.ne.s32.totalorder %s90, %s91
    %p105 = scmp.eq.s32.totalorder %s15, 1
    %p106 = por %p104, %p105
    %p108 = scmp.ne.s32.totalorder %s91, %s107
    %p109 = scmp.eq.s32.totalorder %s15, 0
    %p110 = por %p108, %p109
    %p111 = scmp.le.s32.totalorder 1, %s9
    %p112 = scmp.lt.s32.totalorder %s9, 3
    %p113 = pnand %p111, %p112
    %p114 = pneg %p113
    // Predicated region
    $region9: #{resblock_forward.1} parent=5 // pred_check
      _
    $region10: #{resblock_forward.1} parent=5 // pred_check_branch
      %116 = sbr.rel (%p113) target = $region12
    $region11: #{resblock_forward.1} parent=5 // pred_region
      %s117 = ssub.s32 %s9, 1
      // Predicated region
      $region13: #{resblock_forward.1} parent=11 // pred_check
        %p118 = pneg %p56
      $region14: #{resblock_forward.1} parent=11 // pred_check_branch
        %120 = sbr.rel (%p118) target = $region16
      $region15: #{resblock_forward.1} parent=11 // pred_region
        _
      $region16: #{resblock_forward.1} parent=11 // pred_fallthru
        _
      // Predicated region
      $region17: #{resblock_forward.1} parent=11 // pred_check
        %p121 = pneg %p77
      $region18: #{resblock_forward.1} parent=11 // pred_check_branch
        %123 = sbr.rel (%p121) target = $region20
      $region19: #{resblock_forward.1} parent=11 // pred_region
        _
      $region20: #{resblock_forward.1} parent=11 // pred_fallthru
        _
    $region12: #{resblock_forward.1} parent=5 // pred_fallthru
      _
    %p124 = scmp.lt.s32.totalorder %s9, 2
    // Predicated region
    $region21: #{resblock_forward.1} parent=5 // pred_check
      %p125 = pneg %p124
    $region22: #{resblock_forward.1} parent=5 // pred_check_branch
      %127 = sbr.rel (%p125) target = $region24
    $region23: #{resblock_forward.1} parent=5 // pred_region
      // Predicated region
      $region25: #{resblock_forward.1} parent=23 // pred_check
        %p128 = pneg %p29
      $region26: #{resblock_forward.1} parent=23 // pred_check_branch
        %130 = sbr.rel (%p128) target = $region28
      $region27: #{resblock_forward.1} parent=23 // pred_region
        %p131 = scmp.lt.s32.totalorder %s9, 1
        %s132 = scalar_select %p131, %s9, 1
        %s133 = smul.addr %s132, 2
        %s134 = smul.addr %s133, 4
        %s135 = scalar_lea.vmem %s0, %s134
      $region28: #{resblock_forward.1} parent=23 // pred_fallthru
        _
    $region24: #{resblock_forward.1} parent=5 // pred_fallthru
      _
    %p136 = scmp.le.s32.totalorder 1, %s9
    %p137 = scmp.lt.s32.totalorder %s9, 3
    %p138 = pnand %p136, %p137
    %p139 = pneg %p138
    // Predicated region
    $region29: #{resblock_forward.1} parent=5 // pred_check
      _
    $region30: #{resblock_forward.1} parent=5 // pred_check_branch
      %141 = sbr.rel (%p138) target = $region32
    $region31: #{resblock_forward.1} parent=5 // pred_region
      %s142 = ssub.s32 %s9, 1
      %p143 = scmp.lt.s32.totalorder %s14, 1
      %s144 = scalar_select %p143, %s14, 1
      %s145 = smul.addr %s144, 2
      %s146 = smul.addr %s145, 4
      %s147 = scalar_lea.vmem %s0, %s146
      %p148 = pneg %p35
      %p149 = pneg %p32
      %p150 = pneg %p56
      %p151 = pneg %p53
      %p152 = pneg %p77
      %p153 = pneg %p74
      %p154 = pneg %p103
      %p155 = pneg %p100
      %p156 = scmp.lt.s32.totalorder %s14, 1
      %s157 = scalar_select %p156, %s14, 1
      %s158 = smul.addr %s157, 2
      %s159 = smul.addr %s158, 4
      %s160 = scalar_lea.vmem %s3, %s159
      %p161 = scmp.lt.s32.totalorder %s14, 1
      %s162 = scalar_select %p161, %s14, 1
      %s163 = smul.addr %s162, 2
      %s164 = smul.addr %s163, 4
      %s165 = scalar_lea.vmem %s0, %s164
      %p166 = scmp.lt.s32.totalorder %s14, 1
      %s167 = scalar_select %p166, %s14, 1
      %s168 = smul.addr %s167, 2
      %s169 = smul.addr %s168, 4
      %s170 = scalar_lea.vmem %s3, %s169
      %v172 = vld [vmem:[%s165] sm:$0xff]
      %v173 = vlaneseq
      %v174 = vand.u32 %v173, 127
      %v175 = vadd.s32 %v174, 128
      %v176 = vand.u32 %v174, 255
      %v177 = vand.u32 %v175, 255
      %v178 = vshra.s32 %v176, 4
      %v179 = vshra.s32 %v177, 4
      %v180 = vand.u32 %v176, 15
      %v181 = vand.u32 %v177, 15
      %v183 = vcombine.high %v172, %v172
      %185 = vrot.lane.b32.xlu0 %v172, 17
      %v186 = vpop.permute.xlu0 %185
      %187 = vrot.lane.b32.xlu0 %v183, 17
      %v188 = vpop.permute.xlu0 %187
      %vm189 = vcmp.lt.s32.totalorder %v174, 17
      %v190 = vsel %vm189, %v186, %v188
      %v191 = vsel %vm189, %v188, %v186
      %vm192 = vcmp.ge.s32.totalorder %v178, 1
      %vm193 = vcmp.ge.s32.totalorder %v179, 1
      %vm194 = vcmp.ge.s32.totalorder %v180, 1
      %vm195 = vcmp.ge.s32.totalorder %v181, 1
      %vm196 = vmand %vm192, %vm194
      %vm197 = vmand %vm193, %vm195
      %v198 = vsel %vm196, 1, 0
      %v199 = vsel %vm197, 1, 0
      %vm200 = vcmp.eq.s32.totalorder %v198, 1
      %vm201 = vcmp.eq.s32.totalorder %v199, 1
      %v202 = vsel %vm200, %v191, 0.0
      %v203 = vsel %vm201, %v190, 0.0
      %204 = vrot.lane.b32.xlu0 %v172, 16
      %v205 = vpop.permute.xlu0 %204
      %206 = vrot.lane.b32.xlu0 %v183, 16
      %v207 = vpop.permute.xlu0 %206
      %vm208 = vcmp.lt.s32.totalorder %v174, 16
      %v209 = vsel %vm208, %v205, %v207
      %v210 = vsel %vm208, %v207, %v205
      %v211 = vsel %vm192, 1, 0
      %v212 = vsel %vm193, 1, 0
      %vm213 = vcmp.eq.s32.totalorder %v211, 1
      %vm214 = vcmp.eq.s32.totalorder %v212, 1
      %v215 = vsel %vm213, %v210, 0.0
      %v216 = vsel %vm214, %v209, 0.0
      %217 = vrot.lane.b32.xlu0 %v172, 15
      %v218 = vpop.permute.xlu0 %217
      %219 = vrot.lane.b32.xlu0 %v183, 15
      %v220 = vpop.permute.xlu0 %219
      %vm221 = vcmp.lt.s32.totalorder %v174, 15
      %v222 = vsel %vm221, %v218, %v220
      %v223 = vsel %vm221, %v220, %v218
      %vm224 = vcmp.lt.s32.totalorder %v180, 15
      %vm225 = vcmp.lt.s32.totalorder %v181, 15
      %vm226 = vmand %vm192, %vm224
      %vm227 = vmand %vm193, %vm225
      %v228 = vsel %vm226, 1, 0
      %v229 = vsel %vm227, 1, 0
      %vm230 = vcmp.eq.s32.totalorder %v228, 1
      %vm231 = vcmp.eq.s32.totalorder %v229, 1
      %v232 = vsel %vm230, %v223, 0.0
      %v233 = vsel %vm231, %v222, 0.0
      %234 = vrot.lane.b32.xlu0 %v172, 1
      %v235 = vpop.permute.xlu0 %234
      %236 = vrot.lane.b32.xlu0 %v183, 1
      %v237 = vpop.permute.xlu0 %236
      %vm238 = vcmp.lt.s32.totalorder %v174, 1
      %v239 = vsel %vm238, %v235, %v237
      %v240 = vsel %vm238, %v237, %v235
      %v241 = vsel %vm194, 1, 0
      %v242 = vsel %vm195, 1, 0
      %vm243 = vcmp.eq.s32.totalorder %v241, 1
      %vm244 = vcmp.eq.s32.totalorder %v242, 1
      %v245 = vsel %vm243, %v240, 0.0
      %v246 = vsel %vm244, %v239, 0.0
      %247 = vrot.lane.b32.xlu0 %v172, 127
      %v248 = vpop.permute.xlu0 %247
      %249 = vrot.lane.b32.xlu0 %v183, 127
      %v250 = vpop.permute.xlu0 %249
      %vm251 = vcmp.lt.s32.totalorder %v174, 127
      %v252 = vsel %vm251, %v248, %v250
      %v253 = vsel %vm251, %v250, %v248
      %v254 = vsel %vm224, 1, 0
      %v255 = vsel %vm225, 1, 0
      %vm256 = vcmp.eq.s32.totalorder %v254, 1
      %vm257 = vcmp.eq.s32.totalorder %v255, 1
      %v258 = vsel %vm256, %v252, 0.0
      %v259 = vsel %vm257, %v253, 0.0
      %260 = vrot.lane.b32.xlu0 %v172, 113
      %v261 = vpop.permute.xlu0 %260
      %262 = vrot.lane.b32.xlu0 %v183, 113
      %v263 = vpop.permute.xlu0 %262
      %vm264 = vcmp.lt.s32.totalorder %v174, 113
      %v265 = vsel %vm264, %v261, %v263
      %v266 = vsel %vm264, %v263, %v261
      %vm267 = vcmp.lt.s32.totalorder %v178, 15
      %vm268 = vcmp.lt.s32.totalorder %v179, 15
      %vm269 = vmand %vm267, %vm194
      %vm270 = vmand %vm268, %vm195
      %v271 = vsel %vm269, 1, 0
      %v272 = vsel %vm270, 1, 0
      %vm273 = vcmp.eq.s32.totalorder %v271, 1
      %vm274 = vcmp.eq.s32.totalorder %v272, 1
      %v275 = vsel %vm273, %v265, 0.0
      %v276 = vsel %vm274, %v266, 0.0
      %277 = vrot.lane.b32.xlu0 %v172, 112
      %v278 = vpop.permute.xlu0 %277
      %279 = vrot.lane.b32.xlu0 %v183, 112
      %v280 = vpop.permute.xlu0 %279
      %vm281 = vcmp.lt.s32.totalorder %v174, 112
      %v282 = vsel %vm281, %v278, %v280
      %v283 = vsel %vm281, %v280, %v278
      %v284 = vsel %vm267, 1, 0
      %v285 = vsel %vm268, 1, 0
      %vm286 = vcmp.eq.s32.totalorder %v284, 1
      %vm287 = vcmp.eq.s32.totalorder %v285, 1
      %v288 = vsel %vm286, %v282, 0.0
      %v289 = vsel %vm287, %v283, 0.0
      %290 = vrot.lane.b32.xlu0 %v172, 111
      %v291 = vpop.permute.xlu0 %290
      %292 = vrot.lane.b32.xlu0 %v183, 111
      %v293 = vpop.permute.xlu0 %292
      %vm294 = vcmp.lt.s32.totalorder %v174, 111
      %v295 = vsel %vm294, %v291, %v293
      %v296 = vsel %vm294, %v293, %v291
      %vm297 = vmand %vm267, %vm224
      %vm298 = vmand %vm268, %vm225
      %v299 = vsel %vm297, 1, 0
      %v300 = vsel %vm298, 1, 0
      %vm301 = vcmp.eq.s32.totalorder %v299, 1
      %vm302 = vcmp.eq.s32.totalorder %v300, 1
      %v303 = vsel %vm301, %v295, 0.0
      %v304 = vsel %vm302, %v296, 0.0
      %v307 = vrot.slane %v215, 4
      %v308 = vrot.slane %v216, 4
      %v313 = vrot.slane %v245, 4
      %v314 = vrot.slane %v246, 4
      %v319 = vrot.slane %v258, 4
      %v320 = vrot.slane %v259, 4
      %v325 = vrot.slane %v288, 4
      %v326 = vrot.slane %v289, 4
      %vm329 = vcmask 1043456
      %v330 = vsel %vm329, %v202, %v307
      %v331 = vsel %vm329, %v203, %v308
      %v332 = vsel %vm329, %v232, %v313
      %v333 = vsel %vm329, %v233, %v314
      %v334 = vsel %vm329, %v172, %v319
      %v335 = vsel %vm329, %v183, %v320
      %v336 = vsel %vm329, %v275, %v325
      %v337 = vsel %vm329, %v276, %v326
      %v338 = vsel %vm329, %v303, 1.0
      %v339 = vsel %vm329, %v304, 1.0
      %v340 = vpack.c.bf16 %v332, %v330
      %v341 = vpack.c.bf16 %v333, %v331
      %v342 = vpack.c.bf16 %v336, %v334
      %v343 = vpack.c.bf16 %v337, %v335
      %v344 = vpack.c.bf16 %v338, %v338
      %v345 = vpack.c.bf16 %v339, %v339
      %v346 = vld [vmem:[%s1] sm:$0xf]
      %vm347 = vcmask 302080
      %v349 = vsel %vm347, %v346, 0
      %vm351 = vcmask 1041408
      %vm352 = vcmask 1042432
      %v353 = vsel %vm351, 4294967295, 65535
      %v354 = vsel %vm352, %v353, 0
      %v356 = vand.u32 %v344, %v354
      %v359 = vand.u32 %v345, %v354
      %361 = vmatprep.subr.bf16.mxu0 0
      %362 = vmatpush1.bf16.msra.mxu0 0
      %363 = vmatprep.subr.bf16.mxu0 0
      %364 = vmatpush1.bf16.msra.mxu0 0
      %365 = vmatprep.subr.bf16.mxu0 0
      %366 = vmatpush1.bf16.msra.mxu0 0
      %367 = vmatprep.subr.bf16.mxu0 0
      %368 = vmatpush1.bf16.msra.mxu0 0
      %369 = vmatprep.subr.bf16.mxu0 0
      %370 = vmatpush1.bf16.msra.mxu0 0
      %371 = vmatprep.subr.bf16.mxu0 %v359
      %372 = vmatpush1.bf16.msra.mxu0 %v356
      %373 = vmatprep.subr.bf16.mxu0 %v343
      %374 = vmatpush1.bf16.msra.mxu0 %v342
      %375 = vmatprep.subr.bf16.mxu0 %v341
      %376 = vmatpush1.bf16.msra.mxu0 %v340
      %377 = vmatprep.subr.bf16.mxu0 0
      %378 = vmatpush2.bf16.msra.mxu0 0
      %379 = vmatprep.subr.bf16.mxu0 0
      %380 = vmatpush2.bf16.msra.mxu0 0
      %381 = vmatprep.subr.bf16.mxu0 0
      %382 = vmatpush2.bf16.msra.mxu0 0
      %383 = vmatprep.subr.bf16.mxu0 0
      %384 = vmatpush2.bf16.msra.mxu0 0
      %385 = vmatprep.subr.bf16.mxu0 0
      %386 = vmatpush2.bf16.msra.mxu0 0
      %387 = vmatprep.subr.bf16.mxu0 0
      %388 = vmatpush2.bf16.msra.mxu0 0
      %389 = vmatprep.subr.bf16.mxu0 0
      %390 = vmatpush2.bf16.msra.mxu0 0
      %391 = vmatprep.subr.bf16.mxu0 0
      %392 = vmatpush2.bf16.msra.mxu0 0
      %393 = vmatprep.mubr.bf16.mxu0 0
      %394 = vmatmul.mubr.bf16.gmra.mxu0 %v349
      %v395 = vpop.f32.mrf.mxu0
      %v396 = vadd.f32 0.0, %v395
      %v397 = vpop.f32.mrf.mxu0
      %v398 = vadd.f32 0.0, %v397
      %v399 = vpop.f32.mrf.mxu0
      %v400 = vpop.f32.mrf.mxu0
      %401 = vdwg.mxu0
      %v402 = vmax.f32 %v396, 0.0
      %v403 = vmax.f32 %v398, 0.0
      %v404 = vpack.c.bf16 1.0, %v402
      %v405 = vpack.c.bf16 1.0, %v403
      %v406 = vld [vmem:[%s2] sm:$0x3]
      %vm407 = vcmask 72704
      %v409 = vsel %vm407, %v406, 0
      %vm411 = vcmask 1044480
      %v412 = vsel %vm329, 4294967295, 65535
      %v413 = vsel %vm411, %v412, 0
      %v415 = vand.u32 %v404, %v413
      %v418 = vand.u32 %v405, %v413
      %420 = vmatprep.subr.bf16.mxu0 0
      %421 = vmatpush1.bf16.msra.mxu0 0
      %422 = vmatprep.subr.bf16.mxu0 0
      %423 = vmatpush1.bf16.msra.mxu0 0
      %424 = vmatprep.subr.bf16.mxu0 0
      %425 = vmatpush1.bf16.msra.mxu0 0
      %426 = vmatprep.subr.bf16.mxu0 0
      %427 = vmatpush1.bf16.msra.mxu0 0
      %428 = vmatprep.subr.bf16.mxu0 0
      %429 = vmatpush1.bf16.msra.mxu0 0
      %430 = vmatprep.subr.bf16.mxu0 0
      %431 = vmatpush1.bf16.msra.mxu0 0
      %432 = vmatprep.subr.bf16.mxu0 0
      %433 = vmatpush1.bf16.msra.mxu0 0
      %434 = vmatprep.subr.bf16.mxu0 %v418
      %435 = vmatpush1.bf16.msra.mxu0 %v415
      %436 = vmatprep.subr.bf16.mxu0 0
      %437 = vmatpush2.bf16.msra.mxu0 0
      %438 = vmatprep.subr.bf16.mxu0 0
      %439 = vmatpush2.bf16.msra.mxu0 0
      %440 = vmatprep.subr.bf16.mxu0 0
      %441 = vmatpush2.bf16.msra.mxu0 0
      %442 = vmatprep.subr.bf16.mxu0 0
      %443 = vmatpush2.bf16.msra.mxu0 0
      %444 = vmatprep.subr.bf16.mxu0 0
      %445 = vmatpush2.bf16.msra.mxu0 0
      %446 = vmatprep.subr.bf16.mxu0 0
      %447 = vmatpush2.bf16.msra.mxu0 0
      %448 = vmatprep.subr.bf16.mxu0 0
      %449 = vmatpush2.bf16.msra.mxu0 0
      %450 = vmatprep.subr.bf16.mxu0 0
      %451 = vmatpush2.bf16.msra.mxu0 0
      %452 = vmatprep.mubr.bf16.mxu0 0
      %453 = vmatmul.mubr.bf16.gmra.mxu0 %v409
      %v454 = vpop.f32.mrf.mxu0
      %v455 = vadd.f32 %v172, %v454
      %v456 = vpop.f32.mrf.mxu0
      %v457 = vadd.f32 %v183, %v456
      %v458 = vpop.f32.mrf.mxu0
      %v459 = vpop.f32.mrf.mxu0
      %460 = vdwg.mxu0
      %v461 = vmax.f32 %v455, 0.0
      %v462 = vmax.f32 %v457, 0.0
      %v465 = vcombine.low %v461, %v462
      %467 = vst [vmem:[%s170] sm:$0xff] %v465
      %p468 = scmp.lt.s32.totalorder %s14, 1
      %s469 = scalar_select %p468, %s14, 1
      %s470 = smul.addr %s469, 2
      %s471 = smul.addr %s470, 4
      %s472 = scalar_lea.vmem %s3, %s471
      // Predicated region
      $region33: #{resblock_forward.1} parent=31 // pred_check
        %p473 = pneg %p100
      $region34: #{resblock_forward.1} parent=31 // pred_check_branch
        %475 = sbr.rel (%p473) target = $region36
      $region35: #{resblock_forward.1} parent=31 // pred_region
        _
      $region36: #{resblock_forward.1} parent=31 // pred_fallthru
        _
    $region32: #{resblock_forward.1} parent=5 // pred_fallthru
      _
    %p476 = scmp.le.s32.totalorder 2, %s9
    // Predicated region
    $region37: #{resblock_forward.1} parent=5 // pred_check
      %p477 = pneg %p476
    $region38: #{resblock_forward.1} parent=5 // pred_check_branch
      %479 = sbr.rel (%p477) target = $region40
    $region39: #{resblock_forward.1} parent=5 // pred_region
      %s480 = ssub.s32 %s9, 2
      // Predicated region
      $region41: #{resblock_forward.1} parent=39 // pred_check
        %p481 = pneg %p106
      $region42: #{resblock_forward.1} parent=39 // pred_check_branch
        %483 = sbr.rel (%p481) target = $region44
      $region43: #{resblock_forward.1} parent=39 // pred_region
        %p484 = scmp.lt.s32.totalorder %s15, 1
        %s485 = scalar_select %p484, %s15, 1
        %s486 = smul.addr %s485, 2
        %s487 = smul.addr %s486, 4
        %s488 = scalar_lea.vmem %s3, %s487
      $region44: #{resblock_forward.1} parent=39 // pred_fallthru
        _
    $region40: #{resblock_forward.1} parent=5 // pred_fallthru
      _
  $region6: #{resblock_forward.1} parent=0 // loop_footer
    %s13 = sadd.s32 1, %s9
  $region7: #{resblock_forward.1} parent=0 // loop_footer_branch
    %8 = sbr.rel target = $region3
  $region8: #{resblock_forward.1} parent=0 // loop_exit
    _

</llo_original>
